<compile_context>
chip_gen: v7x
topology: tpu7x:2x2x1
jax: 0.10.0
libtpu: 0.0.40
codegen_flags: <defaults>
</compile_context>

<pallas_src>
import math
import jax
import jax.numpy as jnp
from jax.experimental import pallas as pl
from jax.experimental.pallas import tpu as pltpu

NUM_FEATURES = 32
NUM_CLASSES = 24
HIDDEN = (64, 128, 256, 64)
LANE = 128          # lane-dense padded width of the final layer's output
MAX_TILE_B = 2048   # batch-tile cap (fits comfortably in scoped VMEM on all gens)
SUBLANE = 16        # row granularity: legal for both f32 (8) and packed bf16 (16)


def _round_up(n, m):
    return (n + m - 1) // m * m


def _vmem_limit_bytes():
    """Generation-aware VMEM limit: tighter on v7x (64 MiB physical), roomier on v5e/v6e."""
    try:
        cap = pltpu.get_tpu_info().vmem_capacity_bytes
    except Exception:
        cap = 64 << 20
    return (24 << 20) if cap <= (64 << 20) else (32 << 20)


def _mlp_kernel(x_ref,
                w1_ref, b1_ref,
                w2_ref, b2_ref,
                w3_ref, b3_ref,
                w4_ref, b4_ref,
                w5_ref, b5_ref,
                out_ref):
    """One batch tile: 5 fused MXU matmuls + f32 bias/ReLU on the VPU, all in VMEM."""

    def layer(h, w_ref, b_ref, relu):
        # Cast activations to the weight dtype (bf16 fast path on v6e/v7x; no-op
        # for f32 weights); always accumulate in f32 on the MXU.
        h = jnp.dot(h.astype(w_ref.dtype), w_ref[...],
                    preferred_element_type=jnp.float32)
        h = h + b_ref[...]                       # f32 bias add, broadcast over rows
        return jnp.maximum(h, 0.0) if relu else h

    h = x_ref[...]
    h = layer(h, w1_ref, b1_ref, relu=True)
    h = layer(h, w2_ref, b2_ref, relu=True)
    h = layer(h, w3_ref, b3_ref, relu=True)
    h = layer(h, w4_ref, b4_ref, relu=True)
    h = layer(h, w5_ref, b5_ref, relu=False)     # final layer, zero-padded to 128 lanes
    out_ref[...] = h.astype(out_ref.dtype)


def prepare_params(params, compute_dtype=jnp.bfloat16):
    """One-time preprocessing: cast weights to compute dtype, keep biases f32,
    zero-pad the final layer 24 -> 128 output columns (lane-dense stores)."""
    prepared = []
    n = len(params)
    for li, (w, b) in enumerate(params):
        w = jnp.asarray(w, compute_dtype)
        b = jnp.asarray(b, jnp.float32).reshape(1, -1)
        if li == n - 1 and w.shape[1] < LANE:
            pad_n = LANE - w.shape[1]
            w = jnp.pad(w, ((0, 0), (0, pad_n)))
            b = jnp.pad(b, ((0, 0), (0, pad_n)))
        prepared.append((w, b))
    return prepared


def net2_forward(x, prepared_params, *, out_dtype=jnp.float32):
    """x: [B, 32]. prepared_params: output of prepare_params(). Returns [B, 24] out_dtype."""
    B, F = x.shape
    assert F == NUM_FEATURES

    compute_dtype = prepared_params[0][0].dtype

    # Batch tile: large (amortizes per-step overhead, hits the HBM roofline), a
    # multiple of 16 sublanes, and ~half the batch so v7x's 2 TCs both get a step.
    tile_b = min(MAX_TILE_B, max(SUBLANE, _round_up(pl.cdiv(B, 2), SUBLANE)))

    x_c = x.astype(compute_dtype)
    b_rows = B
    if tile_b > B:                     # only tiny batches (< 16 rows) ever pad
        x_c = jnp.pad(x_c, ((0, tile_b - B), (0, 0)))
        b_rows = tile_b
    grid = (pl.cdiv(b_rows, tile_b),)  # ragged last block handled by Pallas masking

    flat_args = [x_c]
    in_specs = [pl.BlockSpec((tile_b, NUM_FEATURES), lambda i: (i, 0))]
    layer_dims = []
    for (w, b) in prepared_params:
        layer_dims.append(w.shape)
        flat_args += [w, b]
        in_specs += [
            pl.BlockSpec(w.shape, lambda i: (0, 0)),   # weights stay VMEM-resident
            pl.BlockSpec(b.shape, lambda i: (0, 0)),
        ]

    out_shape = jax.ShapeDtypeStruct((b_rows, LANE), out_dtype)

    flops = 2 * b_rows * sum(din * dout for (din, dout) in layer_dims)
    bytes_accessed = (
        x_c.size * x_c.dtype.itemsize
        + sum(a.size * a.dtype.itemsize for a in flat_args[1:])
        + b_rows * LANE * jnp.dtype(out_dtype).itemsize
    )

    out = pl.pallas_call(
        _mlp_kernel,
        grid=grid,
        in_specs=in_specs,
        out_specs=pl.BlockSpec((tile_b, LANE), lambda i: (i, 0)),
        out_shape=out_shape,
        compiler_params=pltpu.CompilerParams(
            dimension_semantics=("parallel",),     # shards batch across v7x's 2 TCs
            vmem_limit_bytes=_vmem_limit_bytes(),
        ),
        cost_estimate=pl.CostEstimate(
            flops=flops, transcendentals=0, bytes_accessed=bytes_accessed),
    )(*flat_args)

    return out[:B, :NUM_CLASSES]


def _xavier_uniform(key, fan_in, fan_out):
    # Matches torch.nn.init.xavier_uniform_ distribution (gain=1).
    bound = math.sqrt(6.0 / (fan_in + fan_out))
    # PyTorch weight is [out, in]; store transposed [in, out] for x @ W.
    return jax.random.uniform(key, (fan_in, fan_out), jnp.float32, -bound, bound)


def init_params(key):
    dims = (NUM_FEATURES,) + HIDDEN + (NUM_CLASSES,)
    params = []
    for i in range(len(dims) - 1):
        key, sub = jax.random.split(key)
        w = _xavier_uniform(sub, dims[i], dims[i + 1])
        b = jnp.full((1, dims[i + 1]), 0.01, jnp.float32)
        params.append((w, b))
    return params


def _reference(x, params):
    h = x
    for i, (w, b) in enumerate(params):
        h = h @ w + b
        if i < len(params) - 1:
            h = jnp.maximum(h, 0.0)
    return h


if __name__ == "__main__":
    key = jax.random.PRNGKey(0)
    key, xkey, xkey2 = jax.random.split(key, 3)
    params = init_params(key)

    params_f32 = prepare_params(params, compute_dtype=jnp.float32)
    params_bf16 = prepare_params(params, compute_dtype=jnp.bfloat16)   # default fast path

    # Small batch (demo shape): single grid step, rows padded to one 16-row tile.
    batch = 8
    x = jax.random.normal(xkey, (batch, NUM_FEATURES), jnp.float32)
    ref = _reference(x, params)

    out_f32 = net2_forward(x, params_f32)
    jax.block_until_ready(out_f32)
    assert out_f32.shape == (batch, NUM_CLASSES)
    assert jnp.allclose(out_f32, ref, atol=1e-5, rtol=1e-5)

    out_bf16 = net2_forward(x, params_bf16)
    jax.block_until_ready(out_bf16)
    assert out_bf16.shape == (batch, NUM_CLASSES)
    assert bool(jnp.all(jnp.isfinite(out_bf16)))
    assert jnp.allclose(out_bf16, ref, atol=1e-1, rtol=1e-1)   # bf16 tolerance

    # Larger, non-multiple batch: 2 grid steps + ragged last block, no wrapper pad.
    batch2 = 300
    x2 = jax.random.normal(xkey2, (batch2, NUM_FEATURES), jnp.float32)
    ref2 = _reference(x2, params)

    out2_f32 = net2_forward(x2, params_f32)
    jax.block_until_ready(out2_f32)
    assert out2_f32.shape == (batch2, NUM_CLASSES)
    assert jnp.allclose(out2_f32, ref2, atol=1e-4, rtol=1e-4)

    out2_bf16 = net2_forward(x2, params_bf16)
    jax.block_until_ready(out2_bf16)
    assert out2_bf16.shape == (batch2, NUM_CLASSES)
    assert bool(jnp.all(jnp.isfinite(out2_bf16)))
    assert jnp.allclose(out2_bf16, ref2, atol=1e-1, rtol=1e-1)

    print("KERNEL_OK")
</pallas_src>

<mosaic_0001>
module attributes {stable_mosaic.version = 11 : i64} {
  func.func @_mlp_kernel(%arg0: i32, %arg1: memref<16x32xf32, #tpu.memory_space<vmem>>, %arg2: memref<32x64xf32, #tpu.memory_space<vmem>>, %arg3: memref<1x64xf32, #tpu.memory_space<vmem>>, %arg4: memref<64x128xf32, #tpu.memory_space<vmem>>, %arg5: memref<1x128xf32, #tpu.memory_space<vmem>>, %arg6: memref<128x256xf32, #tpu.memory_space<vmem>>, %arg7: memref<1x256xf32, #tpu.memory_space<vmem>>, %arg8: memref<256x64xf32, #tpu.memory_space<vmem>>, %arg9: memref<1x64xf32, #tpu.memory_space<vmem>>, %arg10: memref<64x128xf32, #tpu.memory_space<vmem>>, %arg11: memref<1x128xf32, #tpu.memory_space<vmem>>, %arg12: memref<16x128xf32, #tpu.memory_space<vmem>>) attributes {dimension_semantics = [#tpu.dimension_semantics<parallel>], iteration_bounds = array<i64: 1>, scalar_prefetch = 0 : i64, scratch_operands = 0 : i64, tpu.core_type = #tpu.core_type<tc>, window_params = [{transform_indices = @transform_0, window_bounds = array<i64: 16, 32>}, {pipeline_mode = #tpu.pipeline_mode<synchronous>, transform_indices = @transform_1, window_bounds = array<i64: 32, 64>}, {pipeline_mode = #tpu.pipeline_mode<synchronous>, transform_indices = @transform_2, window_bounds = array<i64: 1, 64>}, {pipeline_mode = #tpu.pipeline_mode<synchronous>, transform_indices = @transform_3, window_bounds = array<i64: 64, 128>}, {pipeline_mode = #tpu.pipeline_mode<synchronous>, transform_indices = @transform_4, window_bounds = array<i64: 1, 128>}, {pipeline_mode = #tpu.pipeline_mode<synchronous>, transform_indices = @transform_5, window_bounds = array<i64: 128, 256>}, {pipeline_mode = #tpu.pipeline_mode<synchronous>, transform_indices = @transform_6, window_bounds = array<i64: 1, 256>}, {pipeline_mode = #tpu.pipeline_mode<synchronous>, transform_indices = @transform_7, window_bounds = array<i64: 256, 64>}, {pipeline_mode = #tpu.pipeline_mode<synchronous>, transform_indices = @transform_8, window_bounds = array<i64: 1, 64>}, {pipeline_mode = #tpu.pipeline_mode<synchronous>, transform_indices = @transform_9, window_bounds = array<i64: 64, 128>}, {pipeline_mode = #tpu.pipeline_mode<synchronous>, transform_indices = @transform_10, window_bounds = array<i64: 1, 128>}, {transform_indices = @transform_11, window_bounds = array<i64: 16, 128>}]} {
    %c0 = arith.constant 0 : index
    %c0_0 = arith.constant 0 : index
    %0 = vector.load %arg1[%c0, %c0_0] : memref<16x32xf32, #tpu.memory_space<vmem>>, vector<16x32xf32>
    %c0_1 = arith.constant 0 : index
    %c0_2 = arith.constant 0 : index
    %1 = vector.load %arg2[%c0_1, %c0_2] : memref<32x64xf32, #tpu.memory_space<vmem>>, vector<32x64xf32>
    %cst = arith.constant dense<0.000000e+00> : vector<16x64xf32>
    %2 = tpu.matmul %0, %1, %cst {dimension_numbers = #tpu.dot_dimension_numbers<[1], [0], [0], [1], [0, 0, 1, 1], [], []>} : vector<16x32xf32>, vector<32x64xf32>, vector<16x64xf32> -> vector<16x64xf32>
    %c0_3 = arith.constant 0 : index
    %c0_4 = arith.constant 0 : index
    %3 = vector.load %arg3[%c0_3, %c0_4] : memref<1x64xf32, #tpu.memory_space<vmem>>, vector<1x64xf32>
    %4 = vector.broadcast %3 : vector<1x64xf32> to vector<16x64xf32>
    %5 = arith.addf %2, %4 : vector<16x64xf32>
    %cst_5 = arith.constant 0.000000e+00 : f32
    %6 = vector.broadcast %cst_5 : f32 to vector<16x64xf32>
    %7 = arith.maximumf %5, %6 : vector<16x64xf32>
    %c0_6 = arith.constant 0 : index
    %c0_7 = arith.constant 0 : index
    %8 = vector.load %arg4[%c0_6, %c0_7] : memref<64x128xf32, #tpu.memory_space<vmem>>, vector<64x128xf32>
    %cst_8 = arith.constant dense<0.000000e+00> : vector<16x128xf32>
    %9 = tpu.matmul %7, %8, %cst_8 {dimension_numbers = #tpu.dot_dimension_numbers<[1], [0], [0], [1], [0, 0, 1, 1], [], []>} : vector<16x64xf32>, vector<64x128xf32>, vector<16x128xf32> -> vector<16x128xf32>
    %c0_9 = arith.constant 0 : index
    %c0_10 = arith.constant 0 : index
    %10 = vector.load %arg5[%c0_9, %c0_10] : memref<1x128xf32, #tpu.memory_space<vmem>>, vector<1x128xf32>
    %11 = vector.broadcast %10 : vector<1x128xf32> to vector<16x128xf32>
    %12 = arith.addf %9, %11 : vector<16x128xf32>
    %cst_11 = arith.constant 0.000000e+00 : f32
    %13 = vector.broadcast %cst_11 : f32 to vector<16x128xf32>
    %14 = arith.maximumf %12, %13 : vector<16x128xf32>
    %c0_12 = arith.constant 0 : index
    %c0_13 = arith.constant 0 : index
    %15 = vector.load %arg6[%c0_12, %c0_13] : memref<128x256xf32, #tpu.memory_space<vmem>>, vector<128x256xf32>
    %cst_14 = arith.constant dense<0.000000e+00> : vector<16x256xf32>
    %16 = tpu.matmul %14, %15, %cst_14 {dimension_numbers = #tpu.dot_dimension_numbers<[1], [0], [0], [1], [0, 0, 1, 1], [], []>} : vector<16x128xf32>, vector<128x256xf32>, vector<16x256xf32> -> vector<16x256xf32>
    %c0_15 = arith.constant 0 : index
    %c0_16 = arith.constant 0 : index
    %17 = vector.load %arg7[%c0_15, %c0_16] : memref<1x256xf32, #tpu.memory_space<vmem>>, vector<1x256xf32>
    %18 = vector.broadcast %17 : vector<1x256xf32> to vector<16x256xf32>
    %19 = arith.addf %16, %18 : vector<16x256xf32>
    %cst_17 = arith.constant 0.000000e+00 : f32
    %20 = vector.broadcast %cst_17 : f32 to vector<16x256xf32>
    %21 = arith.maximumf %19, %20 : vector<16x256xf32>
    %c0_18 = arith.constant 0 : index
    %c0_19 = arith.constant 0 : index
    %22 = vector.load %arg8[%c0_18, %c0_19] : memref<256x64xf32, #tpu.memory_space<vmem>>, vector<256x64xf32>
    %cst_20 = arith.constant dense<0.000000e+00> : vector<16x64xf32>
    %23 = tpu.matmul %21, %22, %cst_20 {dimension_numbers = #tpu.dot_dimension_numbers<[1], [0], [0], [1], [0, 0, 1, 1], [], []>} : vector<16x256xf32>, vector<256x64xf32>, vector<16x64xf32> -> vector<16x64xf32>
    %c0_21 = arith.constant 0 : index
    %c0_22 = arith.constant 0 : index
    %24 = vector.load %arg9[%c0_21, %c0_22] : memref<1x64xf32, #tpu.memory_space<vmem>>, vector<1x64xf32>
    %25 = vector.broadcast %24 : vector<1x64xf32> to vector<16x64xf32>
    %26 = arith.addf %23, %25 : vector<16x64xf32>
    %cst_23 = arith.constant 0.000000e+00 : f32
    %27 = vector.broadcast %cst_23 : f32 to vector<16x64xf32>
    %28 = arith.maximumf %26, %27 : vector<16x64xf32>
    %c0_24 = arith.constant 0 : index
    %c0_25 = arith.constant 0 : index
    %29 = vector.load %arg10[%c0_24, %c0_25] : memref<64x128xf32, #tpu.memory_space<vmem>>, vector<64x128xf32>
    %cst_26 = arith.constant dense<0.000000e+00> : vector<16x128xf32>
    %30 = tpu.matmul %28, %29, %cst_26 {dimension_numbers = #tpu.dot_dimension_numbers<[1], [0], [0], [1], [0, 0, 1, 1], [], []>} : vector<16x64xf32>, vector<64x128xf32>, vector<16x128xf32> -> vector<16x128xf32>
    %c0_27 = arith.constant 0 : index
    %c0_28 = arith.constant 0 : index
    %31 = vector.load %arg11[%c0_27, %c0_28] : memref<1x128xf32, #tpu.memory_space<vmem>>, vector<1x128xf32>
    %32 = vector.broadcast %31 : vector<1x128xf32> to vector<16x128xf32>
    %33 = arith.addf %30, %32 : vector<16x128xf32>
    %c0_29 = arith.constant 0 : index
    %c0_30 = arith.constant 0 : index
    %34 = vector.load %arg12[%c0_29, %c0_30] : memref<16x128xf32, #tpu.memory_space<vmem>>, vector<16x128xf32>
    tpu.vector_store %arg12[%c0_29, %c0_30], %33 {strides = array<i32>} : memref<16x128xf32, #tpu.memory_space<vmem>>, vector<16x128xf32>,
    return
  }
  func.func @transform_0(%arg0: i32) -> (i32, i32) {
    %c0_i32 = arith.constant 0 : i32
    %c0_i32_0 = arith.constant 0 : i32
    return %arg0, %c0_i32 : i32, i32
  }
  func.func @transform_1(%arg0: i32) -> (i32, i32) {
    %c0_i32 = arith.constant 0 : i32
    %c0_i32_0 = arith.constant 0 : i32
    %c0_i32_1 = arith.constant 0 : i32
    return %c0_i32, %c0_i32_0 : i32, i32
  }
  func.func @transform_2(%arg0: i32) -> (i32, i32) {
    %c0_i32 = arith.constant 0 : i32
    %c0_i32_0 = arith.constant 0 : i32
    %c0_i32_1 = arith.constant 0 : i32
    return %c0_i32, %c0_i32_0 : i32, i32
  }
  func.func @transform_3(%arg0: i32) -> (i32, i32) {
    %c0_i32 = arith.constant 0 : i32
    %c0_i32_0 = arith.constant 0 : i32
    %c0_i32_1 = arith.constant 0 : i32
    return %c0_i32, %c0_i32_0 : i32, i32
  }
  func.func @transform_4(%arg0: i32) -> (i32, i32) {
    %c0_i32 = arith.constant 0 : i32
    %c0_i32_0 = arith.constant 0 : i32
    %c0_i32_1 = arith.constant 0 : i32
    return %c0_i32, %c0_i32_0 : i32, i32
  }
  func.func @transform_5(%arg0: i32) -> (i32, i32) {
    %c0_i32 = arith.constant 0 : i32
    %c0_i32_0 = arith.constant 0 : i32
    %c0_i32_1 = arith.constant 0 : i32
    return %c0_i32, %c0_i32_0 : i32, i32
  }
  func.func @transform_6(%arg0: i32) -> (i32, i32) {
    %c0_i32 = arith.constant 0 : i32
    %c0_i32_0 = arith.constant 0 : i32
    %c0_i32_1 = arith.constant 0 : i32
    return %c0_i32, %c0_i32_0 : i32, i32
  }
  func.func @transform_7(%arg0: i32) -> (i32, i32) {
    %c0_i32 = arith.constant 0 : i32
    %c0_i32_0 = arith.constant 0 : i32
    %c0_i32_1 = arith.constant 0 : i32
    return %c0_i32, %c0_i32_0 : i32, i32
  }
  func.func @transform_8(%arg0: i32) -> (i32, i32) {
    %c0_i32 = arith.constant 0 : i32
    %c0_i32_0 = arith.constant 0 : i32
    %c0_i32_1 = arith.constant 0 : i32
    return %c0_i32, %c0_i32_0 : i32, i32
  }
  func.func @transform_9(%arg0: i32) -> (i32, i32) {
    %c0_i32 = arith.constant 0 : i32
    %c0_i32_0 = arith.constant 0 : i32
    %c0_i32_1 = arith.constant 0 : i32
    return %c0_i32, %c0_i32_0 : i32, i32
  }
  func.func @transform_10(%arg0: i32) -> (i32, i32) {
    %c0_i32 = arith.constant 0 : i32
    %c0_i32_0 = arith.constant 0 : i32
    %c0_i32_1 = arith.constant 0 : i32
    return %c0_i32, %c0_i32_0 : i32, i32
  }
  func.func @transform_11(%arg0: i32) -> (i32, i32) {
    %c0_i32 = arith.constant 0 : i32
    %c0_i32_0 = arith.constant 0 : i32
    return %arg0, %c0_i32 : i32, i32
  }
}

</mosaic_0001>

<llo_original>
// kernel: tpu_custom_call.1
$region0: #{tpu_custom_call.1}
  #allocation0 [shape = 'u32[]', space=smem, size = 0x4, offset = 0x4, fixed_abs, tag = 'smem constant byte address 0x4 - core index']
  #allocation1 [shape = 'u32[144,128]{1,0:T(1,128)}', space=vmem, size = 0x12000, scoped, tag = 'internal scratch']
  %s0 = inlined_call_operand.vmem [shape: f32[16,32], index: 0, kind: input, shape index: {}]
  %s1 = inlined_call_operand.hbm [shape: f32[32,64], index: 1, kind: input, shape index: {}]
  %s2 = inlined_call_operand.hbm [shape: f32[1,64], index: 2, kind: input, shape index: {}]
  %s3 = inlined_call_operand.vmem [shape: f32[64,128], index: 3, kind: input, shape index: {}]
  %s4 = inlined_call_operand.hbm [shape: f32[1,128], index: 4, kind: input, shape index: {}]
  %s5 = inlined_call_operand.vmem [shape: f32[128,256], index: 5, kind: input, shape index: {}]
  %s6 = inlined_call_operand.vmem [shape: f32[1,256], index: 6, kind: input, shape index: {}]
  %s7 = inlined_call_operand.vmem [shape: f32[256,64], index: 7, kind: input, shape index: {}]
  %s8 = inlined_call_operand.vmem [shape: f32[1,64], index: 8, kind: input, shape index: {}]
  %s9 = inlined_call_operand.vmem [shape: f32[64,128], index: 9, kind: input, shape index: {}]
  %s10 = inlined_call_operand.vmem [shape: f32[1,128], index: 10, kind: input, shape index: {}]
  %s11 = inlined_call_operand.hbm [shape: f32[16,128], index: 11, kind: output, shape index: {}]
  %s12 = sld [smem:[#allocation0]]
  $region66: #{tpu_custom_call.1} parent=0
    _
  %s14 = ssub.s32 1, %s12
  %s15 = scalar_select 0, %s14, %s12
  $region1: #{tpu_custom_call.1} parent=0
    #allocation2 [shape = 'u8[16384]{0}', space=vmem, size = 0x4000, scoped, tag = 'input window, operand 1, single buffered']
    #allocation3 [shape = 's32[1]{0}', space=sflag, size = 0x4, scoped, tag = 'scoped memory for tpu_custom_call.1']
    #allocation4 [shape = 's32[1]{0}', space=sflag, size = 0x4, scoped, tag = 'scoped memory for tpu_custom_call.1']
    #allocation5 [shape = 'u8[512]{0}', space=vmem, size = 0x400, scoped, tag = 'input window, operand 2, single buffered']
    #allocation6 [shape = 's32[1]{0}', space=sflag, size = 0x4, scoped, tag = 'scoped memory for tpu_custom_call.1']
    #allocation7 [shape = 'u8[512]{0}', space=vmem, size = 0x400, scoped, tag = 'input window, operand 4, single buffered']
    #allocation8 [shape = 'u8[8192]{0}', space=vmem, size = 0x2000, scoped, tag = 'output window, operand 0, single buffered']
    %16 = vsyncpa [#allocation3], 0
    %17 = vsyncpa [#allocation6], 0
    %18 = vsyncpa [#allocation4], 0
    // Predicated region
    $region2: #{tpu_custom_call.1} parent=1 // pred_check
      _
    $region3: #{tpu_custom_call.1} parent=1 // pred_check_branch
      %20 = sbr.rel (0) target = $region5
    $region4: #{tpu_custom_call.1} parent=1 // pred_region
      _
    $region5: #{tpu_custom_call.1} parent=1 // pred_fallthru
      _
    // Predicated region
    $region6: #{tpu_custom_call.1} parent=1 // pred_check
      _
    $region7: #{tpu_custom_call.1} parent=1 // pred_check_branch
      %22 = sbr.rel (0) target = $region9
    $region8: #{tpu_custom_call.1} parent=1 // pred_region
      %s24 = ssub.s32 512, 512
      %25 = vsyncadd [#allocation3], %s24
      %s26 = sshll.u32 [#allocation2], 4
      %s27 = int_to_ptr.vmem [resolvable:$true] %s26
      %32 = dma.hbm_to_vmem [thread:$0]  %s1, 512, %s27, [#allocation3], 128, 128, 8
    $region9: #{tpu_custom_call.1} parent=1 // pred_fallthru
      _
    // Predicated region
    $region10: #{tpu_custom_call.1} parent=1 // pred_check
      _
    $region11: #{tpu_custom_call.1} parent=1 // pred_check_branch
      %34 = sbr.rel (0) target = $region13
    $region12: #{tpu_custom_call.1} parent=1 // pred_region
      %s36 = ssub.s32 16, 16
      %37 = vsyncadd [#allocation6], %s36
      %s39 = sshll.u32 [#allocation5], 4
      %s40 = int_to_ptr.vmem [resolvable:$true] %s39
      %42 = dma.hbm_to_vmem [thread:$0]  %s2, 16, %s40, [#allocation6]
    $region13: #{tpu_custom_call.1} parent=1 // pred_fallthru
      _
    // Predicated region
    $region14: #{tpu_custom_call.1} parent=1 // pred_check
      _
    $region15: #{tpu_custom_call.1} parent=1 // pred_check_branch
      %44 = sbr.rel (0) target = $region17
    $region16: #{tpu_custom_call.1} parent=1 // pred_region
      _
    $region17: #{tpu_custom_call.1} parent=1 // pred_fallthru
      _
    // Predicated region
    $region18: #{tpu_custom_call.1} parent=1 // pred_check
      _
    $region19: #{tpu_custom_call.1} parent=1 // pred_check_branch
      %46 = sbr.rel (0) target = $region21
    $region20: #{tpu_custom_call.1} parent=1 // pred_region
      %s48 = ssub.s32 16, 16
      %49 = vsyncadd [#allocation6], %s48
      %s51 = sshll.u32 [#allocation7], 4
      %s52 = int_to_ptr.vmem [resolvable:$true] %s51
      %54 = dma.hbm_to_vmem [thread:$0]  %s4, 16, %s52, [#allocation6]
    $region21: #{tpu_custom_call.1} parent=1 // pred_fallthru
      _
    // Predicated region
    $region22: #{tpu_custom_call.1} parent=1 // pred_check
      _
    $region23: #{tpu_custom_call.1} parent=1 // pred_check_branch
      %56 = sbr.rel (0) target = $region25
    $region24: #{tpu_custom_call.1} parent=1 // pred_region
      _
    $region25: #{tpu_custom_call.1} parent=1 // pred_fallthru
      _
    // Predicated region
    $region26: #{tpu_custom_call.1} parent=1 // pred_check
      _
    $region27: #{tpu_custom_call.1} parent=1 // pred_check_branch
      %58 = sbr.rel (0) target = $region29
    $region28: #{tpu_custom_call.1} parent=1 // pred_region
      _
    $region29: #{tpu_custom_call.1} parent=1 // pred_fallthru
      _
    // Predicated region
    $region30: #{tpu_custom_call.1} parent=1 // pred_check
      _
    $region31: #{tpu_custom_call.1} parent=1 // pred_check_branch
      %60 = sbr.rel (0) target = $region33
    $region32: #{tpu_custom_call.1} parent=1 // pred_region
      _
    $region33: #{tpu_custom_call.1} parent=1 // pred_fallthru
      _
    // Predicated region
    $region34: #{tpu_custom_call.1} parent=1 // pred_check
      _
    $region35: #{tpu_custom_call.1} parent=1 // pred_check_branch
      %62 = sbr.rel (0) target = $region37
    $region36: #{tpu_custom_call.1} parent=1 // pred_region
      _
    $region37: #{tpu_custom_call.1} parent=1 // pred_fallthru
      _
    // Predicated region
    $region38: #{tpu_custom_call.1} parent=1 // pred_check
      _
    $region39: #{tpu_custom_call.1} parent=1 // pred_check_branch
      %64 = sbr.rel (0) target = $region41
    $region40: #{tpu_custom_call.1} parent=1 // pred_region
      _
    $region41: #{tpu_custom_call.1} parent=1 // pred_fallthru
      _
    // Predicated region
    $region42: #{tpu_custom_call.1} parent=1 // pred_check
      _
    $region43: #{tpu_custom_call.1} parent=1 // pred_check_branch
      %66 = sbr.rel (0) target = $region45
    $region44: #{tpu_custom_call.1} parent=1 // pred_region
      _
    $region45: #{tpu_custom_call.1} parent=1 // pred_fallthru
      _
    // Predicated region
    $region46: #{tpu_custom_call.1} parent=1 // pred_check
      _
    $region47: #{tpu_custom_call.1} parent=1 // pred_check_branch
      %68 = sbr.rel (0) target = $region49
    $region48: #{tpu_custom_call.1} parent=1 // pred_region
      %69 = dma.done [#allocation3], 512
    $region49: #{tpu_custom_call.1} parent=1 // pred_fallthru
      _
    // Predicated region
    $region50: #{tpu_custom_call.1} parent=1 // pred_check
      _
    $region51: #{tpu_custom_call.1} parent=1 // pred_check_branch
      %71 = sbr.rel (0) target = $region53
    $region52: #{tpu_custom_call.1} parent=1 // pred_region
      %72 = dma.done [#allocation6], 16
    $region53: #{tpu_custom_call.1} parent=1 // pred_fallthru
      _
    // Predicated region
    $region54: #{tpu_custom_call.1} parent=1 // pred_check
      _
    $region55: #{tpu_custom_call.1} parent=1 // pred_check_branch
      %74 = sbr.rel (0) target = $region57
    $region56: #{tpu_custom_call.1} parent=1 // pred_region
      %75 = dma.done [#allocation6], 16
    $region57: #{tpu_custom_call.1} parent=1 // pred_fallthru
      _
    %v76 = vld [vmem:[%s0] sm:$0xff]
    %v77 = vld [vmem:[%s0 + $0x8] sm:$0xff]
    %v78 = vld [vmem:[#allocation2] sm:$0xff]
    %v79 = vld [vmem:[#allocation2 + $0x8] sm:$0xff]
    %v80 = vld [vmem:[#allocation2 + $0x10] sm:$0xff]
    %v81 = vld [vmem:[#allocation2 + $0x18] sm:$0xff]
    %v82 = vld [vmem:[#allocation5] sm:$0x1]
    %v84 = vlaneseq
    %v85 = vshrl.u32 %v84, 7
    %v86 = vsub.s32 0, %v85
    %v87 = vrot.slane %v82, %v86
    %vm89 = vcmask 261120
    %v91 = vsel %vm89, %v76, 0
    %v94 = vsel %vm89, %v77, 0
    %96 = vmatprep.subr.mxu0 0.0
    %97 = vmatpush1.msra.mxu0 %v78
    %98 = vmatprep.subr.mxu0 0.0
    %99 = vmatpush1.msra.mxu0 %v79
    %100 = vmatprep.subr.mxu0 0.0
    %101 = vmatpush1.msra.mxu0 %v80
    %102 = vmatprep.subr.mxu0 0.0
    %103 = vmatpush1.msra.mxu0 %v81
    %104 = vmatprep.subr.mxu0 0.0
    %105 = vmatpush1.msra.mxu0 0.0
    %106 = vmatprep.subr.mxu0 0.0
    %107 = vmatpush1.msra.mxu0 0.0
    %108 = vmatprep.subr.mxu0 0.0
    %109 = vmatpush1.msra.mxu0 0.0
    %110 = vmatprep.subr.mxu0 0.0
    %111 = vmatpush1.msra.mxu0 0.0
    %112 = vmatprep.subr.mxu0 0.0
    %113 = vmatpush1.msra.mxu0 0.0
    %114 = vmatprep.subr.mxu0 0.0
    %115 = vmatpush1.msra.mxu0 0.0
    %116 = vmatprep.subr.mxu0 0.0
    %117 = vmatpush1.msra.mxu0 0.0
    %118 = vmatprep.subr.mxu0 0.0
    %119 = vmatpush1.msra.mxu0 0.0
    %120 = vmatprep.subr.mxu0 0.0
    %121 = vmatpush1.msra.mxu0 0.0
    %122 = vmatprep.subr.mxu0 0.0
    %123 = vmatpush1.msra.mxu0 0.0
    %124 = vmatprep.subr.mxu0 0.0
    %125 = vmatpush1.msra.mxu0 0.0
    %126 = vmatprep.subr.mxu0 0.0
    %127 = vmatpush1.msra.mxu0 0.0
    %128 = vmatprep.subr.mxu0 0.0
    %129 = vmatpush1.msra.mxu0 0.0
    %130 = vmatprep.subr.mxu0 0.0
    %131 = vmatpush1.msra.mxu0 0.0
    %132 = vmatprep.subr.mxu0 0.0
    %133 = vmatpush1.msra.mxu0 0.0
    %134 = vmatprep.subr.mxu0 0.0
    %135 = vmatpush1.msra.mxu0 0.0
    %136 = vmatprep.subr.mxu0 0.0
    %137 = vmatpush1.msra.mxu0 0.0
    %138 = vmatprep.subr.mxu0 0.0
    %139 = vmatpush1.msra.mxu0 0.0
    %140 = vmatprep.subr.mxu0 0.0
    %141 = vmatpush1.msra.mxu0 0.0
    %142 = vmatprep.subr.mxu0 0.0
    %143 = vmatpush1.msra.mxu0 0.0
    %144 = vmatprep.subr.mxu0 0.0
    %145 = vmatpush1.msra.mxu0 0.0
    %146 = vmatprep.subr.mxu0 0.0
    %147 = vmatpush1.msra.mxu0 0.0
    %148 = vmatprep.subr.mxu0 0.0
    %149 = vmatpush1.msra.mxu0 0.0
    %150 = vmatprep.subr.mxu0 0.0
    %151 = vmatpush1.msra.mxu0 0.0
    %152 = vmatprep.subr.mxu0 0.0
    %153 = vmatpush1.msra.mxu0 0.0
    %154 = vmatprep.subr.mxu0 0.0
    %155 = vmatpush1.msra.mxu0 0.0
    %156 = vmatprep.subr.mxu0 0.0
    %157 = vmatpush1.msra.mxu0 0.0
    %158 = vmatprep.subr.mxu0 0.0
    %159 = vmatpush1.msra.mxu0 0.0
    %160 = vmatprep.mubr.f32.mxu0 0.0
    %161 = vmatmul.mubr.f32.gmra.mrb[0].mxu0 %v91
    %v162 = vpop.f32.mrb[0].mxu0
    %v163 = vadd.f32 %v87, %v162
    %v164 = vpop.f32.mrb[0].mxu0
    %165 = vmatprep.mubr.f32.mxu0 0.0
    %166 = vmatmul.mubr.f32.gmra.mrb[0].mxu0 %v94
    %v167 = vpop.f32.mrb[0].mxu0
    %v168 = vadd.f32 %v87, %v167
    %v169 = vpop.f32.mrb[0].mxu0
    %170 = vdwg.mxu0
    %v171 = vmax.f32 %v163, 0.0
    %v172 = vmax.f32 %v168, 0.0
    %v173 = vld [vmem:[%s3] sm:$0xff]
    %v174 = vld [vmem:[%s3 + $0x8] sm:$0xff]
    %v175 = vld [vmem:[%s3 + $0x10] sm:$0xff]
    %v176 = vld [vmem:[%s3 + $0x18] sm:$0xff]
    %v177 = vld [vmem:[%s3 + $0x20] sm:$0xff]
    %v178 = vld [vmem:[%s3 + $0x28] sm:$0xff]
    %v179 = vld [vmem:[%s3 + $0x30] sm:$0xff]
    %v180 = vld [vmem:[%s3 + $0x38] sm:$0xff]
    %v181 = vld [vmem:[#allocation7] sm:$0x1]
    %v183 = vlaneseq
    %v184 = vshrl.u32 %v183, 7
    %v185 = vsub.s32 0, %v184
    %v186 = vrot.slane %v181, %v185
    %vm188 = vcmask 523264
    %v190 = vsel %vm188, %v171, 0
    %v193 = vsel %vm188, %v172, 0
    %195 = vmatprep.subr.mxu0 0.0
    %196 = vmatpush1.msra.mxu0 %v173
    %197 = vmatprep.subr.mxu0 0.0
    %198 = vmatpush1.msra.mxu0 %v174
    %199 = vmatprep.subr.mxu0 0.0
    %200 = vmatpush1.msra.mxu0 %v175
    %201 = vmatprep.subr.mxu0 0.0
    %202 = vmatpush1.msra.mxu0 %v176
    %203 = vmatprep.subr.mxu0 0.0
    %204 = vmatpush1.msra.mxu0 %v177
    %205 = vmatprep.subr.mxu0 0.0
    %206 = vmatpush1.msra.mxu0 %v178
    %207 = vmatprep.subr.mxu0 0.0
    %208 = vmatpush1.msra.mxu0 %v179
    %209 = vmatprep.subr.mxu0 0.0
    %210 = vmatpush1.msra.mxu0 %v180
    %211 = vmatprep.subr.mxu0 0.0
    %212 = vmatpush1.msra.mxu0 0.0
    %213 = vmatprep.subr.mxu0 0.0
    %214 = vmatpush1.msra.mxu0 0.0
    %215 = vmatprep.subr.mxu0 0.0
    %216 = vmatpush1.msra.mxu0 0.0
    %217 = vmatprep.subr.mxu0 0.0
    %218 = vmatpush1.msra.mxu0 0.0
    %219 = vmatprep.subr.mxu0 0.0
    %220 = vmatpush1.msra.mxu0 0.0
    %221 = vmatprep.subr.mxu0 0.0
    %222 = vmatpush1.msra.mxu0 0.0
    %223 = vmatprep.subr.mxu0 0.0
    %224 = vmatpush1.msra.mxu0 0.0
    %225 = vmatprep.subr.mxu0 0.0
    %226 = vmatpush1.msra.mxu0 0.0
    %227 = vmatprep.subr.mxu0 0.0
    %228 = vmatpush1.msra.mxu0 0.0
    %229 = vmatprep.subr.mxu0 0.0
    %230 = vmatpush1.msra.mxu0 0.0
    %231 = vmatprep.subr.mxu0 0.0
    %232 = vmatpush1.msra.mxu0 0.0
    %233 = vmatprep.subr.mxu0 0.0
    %234 = vmatpush1.msra.mxu0 0.0
    %235 = vmatprep.subr.mxu0 0.0
    %236 = vmatpush1.msra.mxu0 0.0
    %237 = vmatprep.subr.mxu0 0.0
    %238 = vmatpush1.msra.mxu0 0.0
    %239 = vmatprep.subr.mxu0 0.0
    %240 = vmatpush1.msra.mxu0 0.0
    %241 = vmatprep.subr.mxu0 0.0
    %242 = vmatpush1.msra.mxu0 0.0
    %243 = vmatprep.subr.mxu0 0.0
    %244 = vmatpush1.msra.mxu0 0.0
    %245 = vmatprep.subr.mxu0 0.0
    %246 = vmatpush1.msra.mxu0 0.0
    %247 = vmatprep.subr.mxu0 0.0
    %248 = vmatpush1.msra.mxu0 0.0
    %249 = vmatprep.subr.mxu0 0.0
    %250 = vmatpush1.msra.mxu0 0.0
    %251 = vmatprep.subr.mxu0 0.0
    %252 = vmatpush1.msra.mxu0 0.0
    %253 = vmatprep.subr.mxu0 0.0
    %254 = vmatpush1.msra.mxu0 0.0
    %255 = vmatprep.subr.mxu0 0.0
    %256 = vmatpush1.msra.mxu0 0.0
    %257 = vmatprep.subr.mxu0 0.0
    %258 = vmatpush1.msra.mxu0 0.0
    %259 = vmatprep.mubr.f32.mxu0 0.0
    %260 = vmatmul.mubr.f32.gmra.mrb[0].mxu0 %v190
    %v261 = vpop.f32.mrb[0].mxu0
    %v262 = vadd.f32 %v186, %v261
    %v263 = vpop.f32.mrb[0].mxu0
    %264 = vmatprep.mubr.f32.mxu0 0.0
    %265 = vmatmul.mubr.f32.gmra.mrb[0].mxu0 %v193
    %v266 = vpop.f32.mrb[0].mxu0
    %v267 = vadd.f32 %v186, %v266
    %v268 = vpop.f32.mrb[0].mxu0
    %269 = vdwg.mxu0
    %v270 = vmax.f32 %v262, 0.0
    %v271 = vmax.f32 %v267, 0.0
    %v272 = vld [vmem:[%s5] sm:$0xff]
    %v273 = vld [vmem:[%s5 + $0x8] sm:$0xff]
    %v274 = vld [vmem:[%s5 + $0x10] sm:$0xff]
    %v275 = vld [vmem:[%s5 + $0x18] sm:$0xff]
    %v276 = vld [vmem:[%s5 + $0x20] sm:$0xff]
    %v277 = vld [vmem:[%s5 + $0x28] sm:$0xff]
    %v278 = vld [vmem:[%s5 + $0x30] sm:$0xff]
    %v279 = vld [vmem:[%s5 + $0x38] sm:$0xff]
    %v280 = vld [vmem:[%s5 + $0x40] sm:$0xff]
    %v281 = vld [vmem:[%s5 + $0x48] sm:$0xff]
    %v282 = vld [vmem:[%s5 + $0x50] sm:$0xff]
    %v283 = vld [vmem:[%s5 + $0x58] sm:$0xff]
    %v284 = vld [vmem:[%s5 + $0x60] sm:$0xff]
    %v285 = vld [vmem:[%s5 + $0x68] sm:$0xff]
    %v286 = vld [vmem:[%s5 + $0x70] sm:$0xff]
    %v287 = vld [vmem:[%s5 + $0x78] sm:$0xff]
    %v288 = vld [vmem:[%s5 + $0x80] sm:$0xff]
    %v289 = vld [vmem:[%s5 + $0x88] sm:$0xff]
    %v290 = vld [vmem:[%s5 + $0x90] sm:$0xff]
    %v291 = vld [vmem:[%s5 + $0x98] sm:$0xff]
    %v292 = vld [vmem:[%s5 + $0xa0] sm:$0xff]
    %v293 = vld [vmem:[%s5 + $0xa8] sm:$0xff]
    %v294 = vld [vmem:[%s5 + $0xb0] sm:$0xff]
    %v295 = vld [vmem:[%s5 + $0xb8] sm:$0xff]
    %v296 = vld [vmem:[%s5 + $0xc0] sm:$0xff]
    %v297 = vld [vmem:[%s5 + $0xc8] sm:$0xff]
    %v298 = vld [vmem:[%s5 + $0xd0] sm:$0xff]
    %v299 = vld [vmem:[%s5 + $0xd8] sm:$0xff]
    %v300 = vld [vmem:[%s5 + $0xe0] sm:$0xff]
    %v301 = vld [vmem:[%s5 + $0xe8] sm:$0xff]
    %v302 = vld [vmem:[%s5 + $0xf0] sm:$0xff]
    %v303 = vld [vmem:[%s5 + $0xf8] sm:$0xff]
    %v304 = vld [vmem:[%s6] sm:$0x3]
    %v306 = vlaneseq
    %v307 = vshrl.u32 %v306, 7
    %v308 = vsub.s32 0, %v307
    %v309 = vrot.slane %v304, %v308
    %v310 = vlaneseq
    %v311 = vshrl.u32 %v310, 7
    %v312 = vsub.s32 1, %v311
    %v313 = vrot.slane %v304, %v312
    %316 = vmatprep.subr.mxu0 %v273
    %317 = vmatpush1.msra.mxu0 %v272
    %318 = vmatprep.subr.mxu0 %v275
    %319 = vmatpush1.msra.mxu0 %v274
    %320 = vmatprep.subr.mxu0 %v277
    %321 = vmatpush1.msra.mxu0 %v276
    %322 = vmatprep.subr.mxu0 %v279
    %323 = vmatpush1.msra.mxu0 %v278
    %324 = vmatprep.subr.mxu0 %v281
    %325 = vmatpush1.msra.mxu0 %v280
    %326 = vmatprep.subr.mxu0 %v283
    %327 = vmatpush1.msra.mxu0 %v282
    %328 = vmatprep.subr.mxu0 %v285
    %329 = vmatpush1.msra.mxu0 %v284
    %330 = vmatprep.subr.mxu0 %v287
    %331 = vmatpush1.msra.mxu0 %v286
    %332 = vmatprep.subr.mxu0 %v289
    %333 = vmatpush1.msra.mxu0 %v288
    %334 = vmatprep.subr.mxu0 %v291
    %335 = vmatpush1.msra.mxu0 %v290
    %336 = vmatprep.subr.mxu0 %v293
    %337 = vmatpush1.msra.mxu0 %v292
    %338 = vmatprep.subr.mxu0 %v295
    %339 = vmatpush1.msra.mxu0 %v294
    %340 = vmatprep.subr.mxu0 %v297
    %341 = vmatpush1.msra.mxu0 %v296
    %342 = vmatprep.subr.mxu0 %v299
    %343 = vmatpush1.msra.mxu0 %v298
    %344 = vmatprep.subr.mxu0 %v301
    %345 = vmatpush1.msra.mxu0 %v300
    %346 = vmatprep.subr.mxu0 %v303
    %347 = vmatpush1.msra.mxu0 %v302
    %348 = vmatprep.subr.mxu0 0.0
    %349 = vmatpush1.msra.mxu0 0.0
    %350 = vmatprep.subr.mxu0 0.0
    %351 = vmatpush1.msra.mxu0 0.0
    %352 = vmatprep.subr.mxu0 0.0
    %353 = vmatpush1.msra.mxu0 0.0
    %354 = vmatprep.subr.mxu0 0.0
    %355 = vmatpush1.msra.mxu0 0.0
    %356 = vmatprep.subr.mxu0 0.0
    %357 = vmatpush1.msra.mxu0 0.0
    %358 = vmatprep.subr.mxu0 0.0
    %359 = vmatpush1.msra.mxu0 0.0
    %360 = vmatprep.subr.mxu0 0.0
    %361 = vmatpush1.msra.mxu0 0.0
    %362 = vmatprep.subr.mxu0 0.0
    %363 = vmatpush1.msra.mxu0 0.0
    %364 = vmatprep.subr.mxu0 0.0
    %365 = vmatpush1.msra.mxu0 0.0
    %366 = vmatprep.subr.mxu0 0.0
    %367 = vmatpush1.msra.mxu0 0.0
    %368 = vmatprep.subr.mxu0 0.0
    %369 = vmatpush1.msra.mxu0 0.0
    %370 = vmatprep.subr.mxu0 0.0
    %371 = vmatpush1.msra.mxu0 0.0
    %372 = vmatprep.subr.mxu0 0.0
    %373 = vmatpush1.msra.mxu0 0.0
    %374 = vmatprep.subr.mxu0 0.0
    %375 = vmatpush1.msra.mxu0 0.0
    %376 = vmatprep.subr.mxu0 0.0
    %377 = vmatpush1.msra.mxu0 0.0
    %378 = vmatprep.subr.mxu0 0.0
    %379 = vmatpush1.msra.mxu0 0.0
    %380 = vmatprep.mubr.f32.mxu0 0.0
    %381 = vmatmul.mubr.f32.gmra.mrb[0].mxu0 %v270
    %v382 = vpop.f32.mrb[0].mxu0
    %v383 = vadd.f32 %v309, %v382
    %v384 = vpop.f32.mrb[0].mxu0
    %v385 = vadd.f32 %v313, %v384
    %386 = vmatprep.mubr.f32.mxu0 0.0
    %387 = vmatmul.mubr.f32.gmra.mrb[0].mxu0 %v271
    %v388 = vpop.f32.mrb[0].mxu0
    %v389 = vadd.f32 %v309, %v388
    %v390 = vpop.f32.mrb[0].mxu0
    %v391 = vadd.f32 %v313, %v390
    %392 = vdwg.mxu0
    %v393 = vmax.f32 %v383, 0.0
    %v394 = vmax.f32 %v385, 0.0
    %v395 = vmax.f32 %v389, 0.0
    %v396 = vmax.f32 %v391, 0.0
    %v397 = vld [vmem:[%s7] sm:$0xff]
    %v398 = vld [vmem:[%s7 + $0x8] sm:$0xff]
    %v399 = vld [vmem:[%s7 + $0x10] sm:$0xff]
    %v400 = vld [vmem:[%s7 + $0x18] sm:$0xff]
    %v401 = vld [vmem:[%s7 + $0x20] sm:$0xff]
    %v402 = vld [vmem:[%s7 + $0x28] sm:$0xff]
    %v403 = vld [vmem:[%s7 + $0x30] sm:$0xff]
    %v404 = vld [vmem:[%s7 + $0x38] sm:$0xff]
    %v405 = vld [vmem:[%s7 + $0x40] sm:$0xff]
    %v406 = vld [vmem:[%s7 + $0x48] sm:$0xff]
    %v407 = vld [vmem:[%s7 + $0x50] sm:$0xff]
    %v408 = vld [vmem:[%s7 + $0x58] sm:$0xff]
    %v409 = vld [vmem:[%s7 + $0x60] sm:$0xff]
    %v410 = vld [vmem:[%s7 + $0x68] sm:$0xff]
    %v411 = vld [vmem:[%s7 + $0x70] sm:$0xff]
    %v412 = vld [vmem:[%s7 + $0x78] sm:$0xff]
    %v413 = vld [vmem:[%s7 + $0x80] sm:$0xff]
    %v414 = vld [vmem:[%s7 + $0x88] sm:$0xff]
    %v415 = vld [vmem:[%s7 + $0x90] sm:$0xff]
    %v416 = vld [vmem:[%s7 + $0x98] sm:$0xff]
    %v417 = vld [vmem:[%s7 + $0xa0] sm:$0xff]
    %v418 = vld [vmem:[%s7 + $0xa8] sm:$0xff]
    %v419 = vld [vmem:[%s7 + $0xb0] sm:$0xff]
    %v420 = vld [vmem:[%s7 + $0xb8] sm:$0xff]
    %v421 = vld [vmem:[%s7 + $0xc0] sm:$0xff]
    %v422 = vld [vmem:[%s7 + $0xc8] sm:$0xff]
    %v423 = vld [vmem:[%s7 + $0xd0] sm:$0xff]
    %v424 = vld [vmem:[%s7 + $0xd8] sm:$0xff]
    %v425 = vld [vmem:[%s7 + $0xe0] sm:$0xff]
    %v426 = vld [vmem:[%s7 + $0xe8] sm:$0xff]
    %v427 = vld [vmem:[%s7 + $0xf0] sm:$0xff]
    %v428 = vld [vmem:[%s7 + $0xf8] sm:$0xff]
    %v429 = vld [vmem:[%s8] sm:$0x1]
    %v431 = vlaneseq
    %v432 = vshrl.u32 %v431, 7
    %v433 = vsub.s32 0, %v432
    %v434 = vrot.slane %v429, %v433
    %436 = vmatprep.subr.mxu0 0.0
    %437 = vmatpush1.msra.mxu0 %v397
    %438 = vmatprep.subr.mxu0 0.0
    %439 = vmatpush1.msra.mxu0 %v398
    %440 = vmatprep.subr.mxu0 0.0
    %441 = vmatpush1.msra.mxu0 %v399
    %442 = vmatprep.subr.mxu0 0.0
    %443 = vmatpush1.msra.mxu0 %v400
    %444 = vmatprep.subr.mxu0 0.0
    %445 = vmatpush1.msra.mxu0 %v401
    %446 = vmatprep.subr.mxu0 0.0
    %447 = vmatpush1.msra.mxu0 %v402
    %448 = vmatprep.subr.mxu0 0.0
    %449 = vmatpush1.msra.mxu0 %v403
    %450 = vmatprep.subr.mxu0 0.0
    %451 = vmatpush1.msra.mxu0 %v404
    %452 = vmatprep.subr.mxu0 0.0
    %453 = vmatpush1.msra.mxu0 %v405
    %454 = vmatprep.subr.mxu0 0.0
    %455 = vmatpush1.msra.mxu0 %v406
    %456 = vmatprep.subr.mxu0 0.0
    %457 = vmatpush1.msra.mxu0 %v407
    %458 = vmatprep.subr.mxu0 0.0
    %459 = vmatpush1.msra.mxu0 %v408
    %460 = vmatprep.subr.mxu0 0.0
    %461 = vmatpush1.msra.mxu0 %v409
    %462 = vmatprep.subr.mxu0 0.0
    %463 = vmatpush1.msra.mxu0 %v410
    %464 = vmatprep.subr.mxu0 0.0
    %465 = vmatpush1.msra.mxu0 %v411
    %466 = vmatprep.subr.mxu0 0.0
    %467 = vmatpush1.msra.mxu0 %v412
    %468 = vmatprep.subr.mxu0 0.0
    %469 = vmatpush1.msra.mxu0 %v413
    %470 = vmatprep.subr.mxu0 0.0
    %471 = vmatpush1.msra.mxu0 %v414
    %472 = vmatprep.subr.mxu0 0.0
    %473 = vmatpush1.msra.mxu0 %v415
    %474 = vmatprep.subr.mxu0 0.0
    %475 = vmatpush1.msra.mxu0 %v416
    %476 = vmatprep.subr.mxu0 0.0
    %477 = vmatpush1.msra.mxu0 %v417
    %478 = vmatprep.subr.mxu0 0.0
    %479 = vmatpush1.msra.mxu0 %v418
    %480 = vmatprep.subr.mxu0 0.0
    %481 = vmatpush1.msra.mxu0 %v419
    %482 = vmatprep.subr.mxu0 0.0
    %483 = vmatpush1.msra.mxu0 %v420
    %484 = vmatprep.subr.mxu0 0.0
    %485 = vmatpush1.msra.mxu0 %v421
    %486 = vmatprep.subr.mxu0 0.0
    %487 = vmatpush1.msra.mxu0 %v422
    %488 = vmatprep.subr.mxu0 0.0
    %489 = vmatpush1.msra.mxu0 %v423
    %490 = vmatprep.subr.mxu0 0.0
    %491 = vmatpush1.msra.mxu0 %v424
    %492 = vmatprep.subr.mxu0 0.0
    %493 = vmatpush1.msra.mxu0 %v425
    %494 = vmatprep.subr.mxu0 0.0
    %495 = vmatpush1.msra.mxu0 %v426
    %496 = vmatprep.subr.mxu0 0.0
    %497 = vmatpush1.msra.mxu0 %v427
    %498 = vmatprep.subr.mxu0 0.0
    %499 = vmatpush1.msra.mxu0 %v428
    %500 = vmatprep.mubr.f32.mxu0 %v394
    %501 = vmatmul.mubr.f32.gmra.mrb[0].mxu0 %v393
    %v502 = vpop.f32.mrb[0].mxu0
    %v503 = vadd.f32 %v434, %v502
    %v504 = vpop.f32.mrb[0].mxu0
    %505 = vmatprep.mubr.f32.mxu0 %v396
    %506 = vmatmul.mubr.f32.gmra.mrb[0].mxu0 %v395
    %v507 = vpop.f32.mrb[0].mxu0
    %v508 = vadd.f32 %v434, %v507
    %v509 = vpop.f32.mrb[0].mxu0
    %510 = vdwg.mxu0
    %v511 = vmax.f32 %v503, 0.0
    %v512 = vmax.f32 %v508, 0.0
    %v513 = vld [vmem:[%s9] sm:$0xff]
    %v514 = vld [vmem:[%s9 + $0x8] sm:$0xff]
    %v515 = vld [vmem:[%s9 + $0x10] sm:$0xff]
    %v516 = vld [vmem:[%s9 + $0x18] sm:$0xff]
    %v517 = vld [vmem:[%s9 + $0x20] sm:$0xff]
    %v518 = vld [vmem:[%s9 + $0x28] sm:$0xff]
    %v519 = vld [vmem:[%s9 + $0x30] sm:$0xff]
    %v520 = vld [vmem:[%s9 + $0x38] sm:$0xff]
    %v521 = vld [vmem:[%s10] sm:$0x1]
    %v523 = vlaneseq
    %v524 = vshrl.u32 %v523, 7
    %v525 = vsub.s32 0, %v524
    %v526 = vrot.slane %v521, %v525
    %v529 = vsel %vm188, %v511, 0
    %v532 = vsel %vm188, %v512, 0
    %534 = vmatprep.subr.mxu0 0.0
    %535 = vmatpush1.msra.mxu0 %v513
    %536 = vmatprep.subr.mxu0 0.0
    %537 = vmatpush1.msra.mxu0 %v514
    %538 = vmatprep.subr.mxu0 0.0
    %539 = vmatpush1.msra.mxu0 %v515
    %540 = vmatprep.subr.mxu0 0.0
    %541 = vmatpush1.msra.mxu0 %v516
    %542 = vmatprep.subr.mxu0 0.0
    %543 = vmatpush1.msra.mxu0 %v517
    %544 = vmatprep.subr.mxu0 0.0
    %545 = vmatpush1.msra.mxu0 %v518
    %546 = vmatprep.subr.mxu0 0.0
    %547 = vmatpush1.msra.mxu0 %v519
    %548 = vmatprep.subr.mxu0 0.0
    %549 = vmatpush1.msra.mxu0 %v520
    %550 = vmatprep.subr.mxu0 0.0
    %551 = vmatpush1.msra.mxu0 0.0
    %552 = vmatprep.subr.mxu0 0.0
    %553 = vmatpush1.msra.mxu0 0.0
    %554 = vmatprep.subr.mxu0 0.0
    %555 = vmatpush1.msra.mxu0 0.0
    %556 = vmatprep.subr.mxu0 0.0
    %557 = vmatpush1.msra.mxu0 0.0
    %558 = vmatprep.subr.mxu0 0.0
    %559 = vmatpush1.msra.mxu0 0.0
    %560 = vmatprep.subr.mxu0 0.0
    %561 = vmatpush1.msra.mxu0 0.0
    %562 = vmatprep.subr.mxu0 0.0
    %563 = vmatpush1.msra.mxu0 0.0
    %564 = vmatprep.subr.mxu0 0.0
    %565 = vmatpush1.msra.mxu0 0.0
    %566 = vmatprep.subr.mxu0 0.0
    %567 = vmatpush1.msra.mxu0 0.0
    %568 = vmatprep.subr.mxu0 0.0
    %569 = vmatpush1.msra.mxu0 0.0
    %570 = vmatprep.subr.mxu0 0.0
    %571 = vmatpush1.msra.mxu0 0.0
    %572 = vmatprep.subr.mxu0 0.0
    %573 = vmatpush1.msra.mxu0 0.0
    %574 = vmatprep.subr.mxu0 0.0
    %575 = vmatpush1.msra.mxu0 0.0
    %576 = vmatprep.subr.mxu0 0.0
    %577 = vmatpush1.msra.mxu0 0.0
    %578 = vmatprep.subr.mxu0 0.0
    %579 = vmatpush1.msra.mxu0 0.0
    %580 = vmatprep.subr.mxu0 0.0
    %581 = vmatpush1.msra.mxu0 0.0
    %582 = vmatprep.subr.mxu0 0.0
    %583 = vmatpush1.msra.mxu0 0.0
    %584 = vmatprep.subr.mxu0 0.0
    %585 = vmatpush1.msra.mxu0 0.0
    %586 = vmatprep.subr.mxu0 0.0
    %587 = vmatpush1.msra.mxu0 0.0
    %588 = vmatprep.subr.mxu0 0.0
    %589 = vmatpush1.msra.mxu0 0.0
    %590 = vmatprep.subr.mxu0 0.0
    %591 = vmatpush1.msra.mxu0 0.0
    %592 = vmatprep.subr.mxu0 0.0
    %593 = vmatpush1.msra.mxu0 0.0
    %594 = vmatprep.subr.mxu0 0.0
    %595 = vmatpush1.msra.mxu0 0.0
    %596 = vmatprep.subr.mxu0 0.0
    %597 = vmatpush1.msra.mxu0 0.0
    %598 = vmatprep.mubr.f32.mxu0 0.0
    %599 = vmatmul.mubr.f32.gmra.mrb[0].mxu0 %v529
    %v600 = vpop.f32.mrb[0].mxu0
    %v601 = vadd.f32 %v526, %v600
    %v602 = vpop.f32.mrb[0].mxu0
    %603 = vmatprep.mubr.f32.mxu0 0.0
    %604 = vmatmul.mubr.f32.gmra.mrb[0].mxu0 %v532
    %v605 = vpop.f32.mrb[0].mxu0
    %v606 = vadd.f32 %v526, %v605
    %v607 = vpop.f32.mrb[0].mxu0
    %608 = vdwg.mxu0
    %609 = vst [vmem:[#allocation8] sm:$0xff] %v601
    %610 = vst [vmem:[#allocation8 + $0x8] sm:$0xff] %v606
    // Predicated region
    $region58: #{tpu_custom_call.1} parent=1 // pred_check
      _
    $region59: #{tpu_custom_call.1} parent=1 // pred_check_branch
      %612 = sbr.rel (0) target = $region61
    $region60: #{tpu_custom_call.1} parent=1 // pred_region
      %s614 = ssub.s32 256, 256
      %615 = vsyncadd [#allocation4], %s614
      %s616 = sshll.u32 [#allocation8], 4
      %s617 = int_to_ptr.vmem [resolvable:$true] %s616
      %622 = dma.vmem_to_hbm [thread:$0]  %s617, 256, %s11, [#allocation4], 128, 128, 8
    $region61: #{tpu_custom_call.1} parent=1 // pred_fallthru
      _
    // Predicated region
    $region62: #{tpu_custom_call.1} parent=1 // pred_check
      _
    $region63: #{tpu_custom_call.1} parent=1 // pred_check_branch
      %624 = sbr.rel (0) target = $region65
    $region64: #{tpu_custom_call.1} parent=1 // pred_region
      %625 = dma.done [#allocation4], 256
    $region65: #{tpu_custom_call.1} parent=1 // pred_fallthru
      _
    %626 = vsyncpa [#allocation3], 1
    %627 = vsyncpa [#allocation6], 1
    %628 = vsyncpa [#allocation4], 1

</llo_original>
